<compile_context>
chip_gen: v6e
topology: v6e:2x2x1
jax: 0.10.0
libtpu: 0.0.40
codegen_flags: <defaults>
</compile_context>

<pallas_src>
import jax
import jax.numpy as jnp
from jax.experimental import pallas as pl
from jax.experimental.pallas import tpu as pltpu

# Small, module-consistent sizes.
B, S = 2, 8          # batch, 1 + num_negative_samples
DL, DH = 16, 16      # latent feature dim, flattened design+obs dim
E = 32               # encoding_dim of each encoder network
HID = 512            # default head hidden width
BS = B * S


def critic_joint_kernel(lat_ref, hist_ref,
                        wl_ref, bl_ref, wh_ref, bh_ref,
                        w1h_ref, w1l_ref, b1_ref, w2_ref, b2_ref,
                        out_ref):
    # --- latent encoder: Linear(DL, E) + ReLU, per (batch, sample) row.
    lat_enc = jnp.dot(lat_ref[...], wl_ref[...],
                      preferred_element_type=jnp.float32) + bl_ref[...]
    lat_enc = jnp.maximum(lat_enc, 0.0)                          # [BS, E]

    # --- history encoder: Linear(DH, E) + ReLU, once per batch row.
    hist_enc = jnp.dot(hist_ref[...], wh_ref[...],
                       preferred_element_type=jnp.float32) + bh_ref[...]
    hist_enc = jnp.maximum(hist_enc, 0.0)                        # [B, E]

    # --- critic_l1 with split weights.  Equivalent to the original
    #     cat([hist_exp, lat_enc], -1) @ [[w1_hist], [w1_lat]] + b1,
    # but computes the history half once per batch row and avoids the concat.
    lat_head = jnp.dot(lat_enc, w1l_ref[...],
                       preferred_element_type=jnp.float32)       # [BS, HID]
    hist_head = jnp.dot(hist_enc, w1h_ref[...],
                        preferred_element_type=jnp.float32)      # [B, HID]
    h = lat_head.reshape(B, S, HID) + hist_head[:, None, :] + b1_ref[...]
    h = jnp.maximum(h, 0.0)                                      # [B, S, HID]

    # --- critic_output: Linear(HID, 1) as a VPU multiply + lane reduction
    #     (w2 stored as [1, HID]); bias is a (1,1) block broadcast over [B,S].
    score = jnp.sum(h * w2_ref[...], axis=-1) + b2_ref[...]      # [B, S]
    out_ref[...] = score


def critic_joint_forward(latent, design, obs, params):
    """latent: [B,S,DL] or [N,B,S,DL]; design/obs: [B,DH//2] or [N,B,DH//2]."""
    single = latent.ndim == 3
    if single:
        latent, design, obs = latent[None], design[None], obs[None]
    N = latent.shape[0]

    lat_flat = latent.reshape(N, BS, DL)
    hist = jnp.concatenate([design, obs], axis=-1)               # [N, B, DH]

    def wspec(shape):
        # Whole-array weight block, constant block index -> VMEM-resident
        # across all grid steps (no per-step re-DMA).
        return pl.BlockSpec(shape, lambda i: (0, 0))

    score = pl.pallas_call(
        critic_joint_kernel,
        out_shape=jax.ShapeDtypeStruct((N, B, S), jnp.float32),
        grid_spec=pltpu.PrefetchScalarGridSpec(
            num_scalar_prefetch=0,
            grid=(N,),
            in_specs=[
                pl.BlockSpec((None, BS, DL), lambda i: (i, 0, 0)),  # latent
                pl.BlockSpec((None, B, DH), lambda i: (i, 0, 0)),   # history
                wspec((DL, E)), wspec((1, E)),                      # wl, bl
                wspec((DH, E)), wspec((1, E)),                      # wh, bh
                wspec((E, HID)), wspec((E, HID)), wspec((1, HID)),  # w1h, w1l, b1
                wspec((1, HID)),                                    # w2 (row)
                wspec((1, 1)),                                      # b2
            ],
            out_specs=pl.BlockSpec((None, B, S), lambda i: (i, 0, 0)),
        ),
        compiler_params=pltpu.CompilerParams(
            dimension_semantics=("parallel",),
            vmem_limit_bytes=8 << 20,
        ),
    )(lat_flat, hist,
      params["wl"], params["bl"], params["wh"], params["bh"],
      params["w1_hist"], params["w1_lat"], params["b1"],
      params["w2"], params["b2"])

    # Pos/neg masking in the wrapper (trivially fused by XLA).
    is_pos = jnp.arange(S)[None, None, :] == 0
    scores_joint = jnp.where(is_pos, score, 0.0)
    scores_prod = jnp.where(is_pos, 0.0, score)
    if single:
        return scores_joint[0], scores_prod[0]
    return scores_joint, scores_prod


def init_params(key):
    """Deterministic, torch-Linear-style uniform(-1/sqrt(fan_in), +) init."""
    ks = jax.random.split(key, 8)

    def lin(kw, kb, fan_in, fan_out):
        bound = 1.0 / jnp.sqrt(jnp.float32(fan_in))
        w = jax.random.uniform(kw, (fan_in, fan_out), jnp.float32, -bound, bound)
        b = jax.random.uniform(kb, (1, fan_out), jnp.float32, -bound, bound)
        return w, b

    wl, bl = lin(ks[0], ks[1], DL, E)        # latent encoder
    wh, bh = lin(ks[2], ks[3], DH, E)        # history encoder
    w1, b1 = lin(ks[4], ks[5], 2 * E, HID)   # critic_l1 (rows: [hist | lat])
    w2, b2 = lin(ks[6], ks[7], HID, 1)       # critic_output
    return dict(wl=wl, bl=bl, wh=wh, bh=bh,
                w1_hist=w1[:E], w1_lat=w1[E:], b1=b1,
                w2=w2.T,                      # stored as [1, HID]
                b2=b2)                        # (1, 1)


def reference_forward_single(latent, design, obs, p):
    """Pure-JAX reference, faithful to the torch module (single instance)."""
    lat_flat = latent.reshape(BS, DL)
    hist_in = jnp.concatenate([design, obs], axis=-1)
    lat_enc = jnp.maximum(lat_flat @ p["wl"] + p["bl"], 0.0)
    hist_enc = jnp.maximum(hist_in @ p["wh"] + p["bh"], 0.0)
    hist_exp = jnp.broadcast_to(hist_enc[:, None, :], (B, S, E)).reshape(BS, E)
    inputs = jnp.concatenate([hist_exp, lat_enc], axis=-1)
    w1 = jnp.concatenate([p["w1_hist"], p["w1_lat"]], axis=0)
    h = jnp.maximum(inputs @ w1 + p["b1"], 0.0)
    score = (h @ p["w2"].T + p["b2"]).reshape(B, S)
    pos = jnp.arange(S)[None, :] == 0
    return jnp.where(pos, score, 0.0), jnp.where(pos, 0.0, score)


if __name__ == "__main__":
    N = 4  # number of forward evaluations batched under one pallas_call
    key = jax.random.PRNGKey(0)
    k_lat, k_des, k_obs, k_par = jax.random.split(key, 4)

    latent = jax.random.normal(k_lat, (N, B, S, DL), jnp.float32)
    design = jax.random.normal(k_des, (N, B, DH // 2), jnp.float32)
    obs = jax.random.normal(k_obs, (N, B, DH // 2), jnp.float32)
    params = init_params(k_par)

    # Grid-batched path (grid=(N,), weights resident in VMEM).
    sj, sp = critic_joint_forward(latent, design, obs, params)
    jax.block_until_ready((sj, sp))

    ref_j, ref_p = jax.vmap(
        lambda l, d, o: reference_forward_single(l, d, o, params)
    )(latent, design, obs)
    assert sj.shape == (N, B, S) and sp.shape == (N, B, S)
    assert jnp.allclose(sj, ref_j, atol=1e-4, rtol=1e-4)
    assert jnp.allclose(sp, ref_p, atol=1e-4, rtol=1e-4)
    # first column of scores_prod is zero, rest of scores_joint is zero
    assert jnp.all(sp[..., 0] == 0.0)
    assert jnp.all(sj[..., 1:] == 0.0)

    # Single-instance path (original module call signature).
    sj1, sp1 = critic_joint_forward(latent[0], design[0], obs[0], params)
    jax.block_until_ready((sj1, sp1))
    assert sj1.shape == (B, S) and sp1.shape == (B, S)
    assert jnp.allclose(sj1, ref_j[0], atol=1e-4, rtol=1e-4)
    assert jnp.allclose(sp1, ref_p[0], atol=1e-4, rtol=1e-4)

    print("KERNEL_OK")
</pallas_src>

<mosaic_0001>
module attributes {stable_mosaic.version = 11 : i64} {
  func.func @critic_joint_kernel(%arg0: i32, %arg1: memref<1x16x16xf32, #tpu.memory_space<vmem>>, %arg2: memref<1x2x16xf32, #tpu.memory_space<vmem>>, %arg3: memref<16x32xf32, #tpu.memory_space<vmem>>, %arg4: memref<1x32xf32, #tpu.memory_space<vmem>>, %arg5: memref<16x32xf32, #tpu.memory_space<vmem>>, %arg6: memref<1x32xf32, #tpu.memory_space<vmem>>, %arg7: memref<32x512xf32, #tpu.memory_space<vmem>>, %arg8: memref<32x512xf32, #tpu.memory_space<vmem>>, %arg9: memref<1x512xf32, #tpu.memory_space<vmem>>, %arg10: memref<1x512xf32, #tpu.memory_space<vmem>>, %arg11: memref<1x1xf32, #tpu.memory_space<vmem>>, %arg12: memref<1x2x8xf32, #tpu.memory_space<vmem>>) attributes {dimension_semantics = [#tpu.dimension_semantics<parallel>], iteration_bounds = array<i64: 4>, scalar_prefetch = 0 : i64, scratch_operands = 0 : i64, tpu.core_type = #tpu.core_type<tc>, window_params = [{transform_indices = @transform_0, window_bounds = array<i64: 1, 16, 16>}, {transform_indices = @transform_1, window_bounds = array<i64: 1, 2, 16>}, {pipeline_mode = #tpu.pipeline_mode<synchronous>, transform_indices = @transform_2, window_bounds = array<i64: 16, 32>}, {pipeline_mode = #tpu.pipeline_mode<synchronous>, transform_indices = @transform_3, window_bounds = array<i64: 1, 32>}, {pipeline_mode = #tpu.pipeline_mode<synchronous>, transform_indices = @transform_4, window_bounds = array<i64: 16, 32>}, {pipeline_mode = #tpu.pipeline_mode<synchronous>, transform_indices = @transform_5, window_bounds = array<i64: 1, 32>}, {pipeline_mode = #tpu.pipeline_mode<synchronous>, transform_indices = @transform_6, window_bounds = array<i64: 32, 512>}, {pipeline_mode = #tpu.pipeline_mode<synchronous>, transform_indices = @transform_7, window_bounds = array<i64: 32, 512>}, {pipeline_mode = #tpu.pipeline_mode<synchronous>, transform_indices = @transform_8, window_bounds = array<i64: 1, 512>}, {pipeline_mode = #tpu.pipeline_mode<synchronous>, transform_indices = @transform_9, window_bounds = array<i64: 1, 512>}, {pipeline_mode = #tpu.pipeline_mode<synchronous>, transform_indices = @transform_10, window_bounds = array<i64: 1, 1>}, {transform_indices = @transform_11, window_bounds = array<i64: 1, 2, 8>}]} {
    %c0 = arith.constant 0 : index
    %c0_0 = arith.constant 0 : index
    %c0_1 = arith.constant 0 : index
    %0 = vector.load %arg1[%c0, %c0_0, %c0_1] : memref<1x16x16xf32, #tpu.memory_space<vmem>>, vector<1x16x16xf32>
    %1 = vector.shape_cast %0 : vector<1x16x16xf32> to vector<16x16xf32>
    %c0_2 = arith.constant 0 : index
    %c0_3 = arith.constant 0 : index
    %2 = vector.load %arg3[%c0_2, %c0_3] : memref<16x32xf32, #tpu.memory_space<vmem>>, vector<16x32xf32>
    %cst = arith.constant dense<0.000000e+00> : vector<16x32xf32>
    %3 = tpu.matmul %1, %2, %cst {dimension_numbers = #tpu.dot_dimension_numbers<[1], [0], [0], [1], [0, 0, 1, 1], [], []>} : vector<16x16xf32>, vector<16x32xf32>, vector<16x32xf32> -> vector<16x32xf32>
    %c0_4 = arith.constant 0 : index
    %c0_5 = arith.constant 0 : index
    %4 = vector.load %arg4[%c0_4, %c0_5] : memref<1x32xf32, #tpu.memory_space<vmem>>, vector<1x32xf32>
    %5 = vector.broadcast %4 : vector<1x32xf32> to vector<16x32xf32>
    %6 = arith.addf %3, %5 : vector<16x32xf32>
    %cst_6 = arith.constant 0.000000e+00 : f32
    %7 = vector.broadcast %cst_6 : f32 to vector<16x32xf32>
    %8 = arith.maximumf %6, %7 : vector<16x32xf32>
    %c0_7 = arith.constant 0 : index
    %c0_8 = arith.constant 0 : index
    %c0_9 = arith.constant 0 : index
    %9 = vector.load %arg2[%c0_7, %c0_8, %c0_9] : memref<1x2x16xf32, #tpu.memory_space<vmem>>, vector<1x2x16xf32>
    %10 = vector.shape_cast %9 : vector<1x2x16xf32> to vector<2x16xf32>
    %c0_10 = arith.constant 0 : index
    %c0_11 = arith.constant 0 : index
    %11 = vector.load %arg5[%c0_10, %c0_11] : memref<16x32xf32, #tpu.memory_space<vmem>>, vector<16x32xf32>
    %cst_12 = arith.constant dense<0.000000e+00> : vector<2x32xf32>
    %12 = tpu.matmul %10, %11, %cst_12 {dimension_numbers = #tpu.dot_dimension_numbers<[1], [0], [0], [1], [0, 0, 1, 1], [], []>} : vector<2x16xf32>, vector<16x32xf32>, vector<2x32xf32> -> vector<2x32xf32>
    %c0_13 = arith.constant 0 : index
    %c0_14 = arith.constant 0 : index
    %13 = vector.load %arg6[%c0_13, %c0_14] : memref<1x32xf32, #tpu.memory_space<vmem>>, vector<1x32xf32>
    %14 = vector.broadcast %13 : vector<1x32xf32> to vector<2x32xf32>
    %15 = arith.addf %12, %14 : vector<2x32xf32>
    %cst_15 = arith.constant 0.000000e+00 : f32
    %16 = vector.broadcast %cst_15 : f32 to vector<2x32xf32>
    %17 = arith.maximumf %15, %16 : vector<2x32xf32>
    %c0_16 = arith.constant 0 : index
    %c0_17 = arith.constant 0 : index
    %18 = vector.load %arg8[%c0_16, %c0_17] : memref<32x512xf32, #tpu.memory_space<vmem>>, vector<32x512xf32>
    %cst_18 = arith.constant dense<0.000000e+00> : vector<16x512xf32>
    %19 = tpu.matmul %8, %18, %cst_18 {dimension_numbers = #tpu.dot_dimension_numbers<[1], [0], [0], [1], [0, 0, 1, 1], [], []>} : vector<16x32xf32>, vector<32x512xf32>, vector<16x512xf32> -> vector<16x512xf32>
    %c0_19 = arith.constant 0 : index
    %c0_20 = arith.constant 0 : index
    %20 = vector.load %arg7[%c0_19, %c0_20] : memref<32x512xf32, #tpu.memory_space<vmem>>, vector<32x512xf32>
    %cst_21 = arith.constant dense<0.000000e+00> : vector<2x512xf32>
    %21 = tpu.matmul %17, %20, %cst_21 {dimension_numbers = #tpu.dot_dimension_numbers<[1], [0], [0], [1], [0, 0, 1, 1], [], []>} : vector<2x32xf32>, vector<32x512xf32>, vector<2x512xf32> -> vector<2x512xf32>
    %22 = vector.shape_cast %19 : vector<16x512xf32> to vector<2x8x512xf32>
    %23 = vector.shape_cast %21 : vector<2x512xf32> to vector<2x1x512xf32>
    %24 = vector.broadcast %23 : vector<2x1x512xf32> to vector<2x8x512xf32>
    %25 = arith.addf %22, %24 : vector<2x8x512xf32>
    %c0_22 = arith.constant 0 : index
    %c0_23 = arith.constant 0 : index
    %26 = vector.load %arg9[%c0_22, %c0_23] : memref<1x512xf32, #tpu.memory_space<vmem>>, vector<1x512xf32>
    %27 = vector.shape_cast %26 : vector<1x512xf32> to vector<1x1x512xf32>
    %28 = vector.broadcast %27 : vector<1x1x512xf32> to vector<2x8x512xf32>
    %29 = arith.addf %25, %28 : vector<2x8x512xf32>
    %cst_24 = arith.constant 0.000000e+00 : f32
    %30 = vector.broadcast %cst_24 : f32 to vector<2x8x512xf32>
    %31 = arith.maximumf %29, %30 : vector<2x8x512xf32>
    %c0_25 = arith.constant 0 : index
    %c0_26 = arith.constant 0 : index
    %32 = vector.load %arg10[%c0_25, %c0_26] : memref<1x512xf32, #tpu.memory_space<vmem>>, vector<1x512xf32>
    %33 = vector.shape_cast %32 : vector<1x512xf32> to vector<1x1x512xf32>
    %34 = vector.broadcast %33 : vector<1x1x512xf32> to vector<2x8x512xf32>
    %35 = arith.mulf %31, %34 : vector<2x8x512xf32>
    %cst_27 = arith.constant dense<0.000000e+00> : vector<2x8xf32>
    %36 = vector.multi_reduction <add>, %35, %cst_27 [2] : vector<2x8x512xf32> to vector<2x8xf32>
    %c0_28 = arith.constant 0 : index
    %c0_29 = arith.constant 0 : index
    %37 = vector.load %arg11[%c0_28, %c0_29] : memref<1x1xf32, #tpu.memory_space<vmem>>, vector<1x1xf32>
    %38 = vector.broadcast %37 : vector<1x1xf32> to vector<2x8xf32>
    %39 = arith.addf %36, %38 : vector<2x8xf32>
    %c0_30 = arith.constant 0 : index
    %c0_31 = arith.constant 0 : index
    %c0_32 = arith.constant 0 : index
    %40 = vector.load %arg12[%c0_30, %c0_31, %c0_32] : memref<1x2x8xf32, #tpu.memory_space<vmem>>, vector<1x2x8xf32>
    %41 = vector.shape_cast %40 : vector<1x2x8xf32> to vector<2x8xf32>
    %42 = vector.shape_cast %39 : vector<2x8xf32> to vector<1x2x8xf32>
    tpu.vector_store %arg12[%c0_30, %c0_31, %c0_32], %42 {strides = array<i32>} : memref<1x2x8xf32, #tpu.memory_space<vmem>>, vector<1x2x8xf32>,
    return
  }
  func.func @transform_0(%arg0: i32) -> (i32, i32, i32) {
    %c0_i32 = arith.constant 0 : i32
    %c0_i32_0 = arith.constant 0 : i32
    %c0_i32_1 = arith.constant 0 : i32
    return %arg0, %c0_i32, %c0_i32_0 : i32, i32, i32
  }
  func.func @transform_1(%arg0: i32) -> (i32, i32, i32) {
    %c0_i32 = arith.constant 0 : i32
    %c0_i32_0 = arith.constant 0 : i32
    %c0_i32_1 = arith.constant 0 : i32
    return %arg0, %c0_i32, %c0_i32_0 : i32, i32, i32
  }
  func.func @transform_2(%arg0: i32) -> (i32, i32) {
    %c0_i32 = arith.constant 0 : i32
    %c0_i32_0 = arith.constant 0 : i32
    %c0_i32_1 = arith.constant 0 : i32
    return %c0_i32, %c0_i32_0 : i32, i32
  }
  func.func @transform_3(%arg0: i32) -> (i32, i32) {
    %c0_i32 = arith.constant 0 : i32
    %c0_i32_0 = arith.constant 0 : i32
    %c0_i32_1 = arith.constant 0 : i32
    return %c0_i32, %c0_i32_0 : i32, i32
  }
  func.func @transform_4(%arg0: i32) -> (i32, i32) {
    %c0_i32 = arith.constant 0 : i32
    %c0_i32_0 = arith.constant 0 : i32
    %c0_i32_1 = arith.constant 0 : i32
    return %c0_i32, %c0_i32_0 : i32, i32
  }
  func.func @transform_5(%arg0: i32) -> (i32, i32) {
    %c0_i32 = arith.constant 0 : i32
    %c0_i32_0 = arith.constant 0 : i32
    %c0_i32_1 = arith.constant 0 : i32
    return %c0_i32, %c0_i32_0 : i32, i32
  }
  func.func @transform_6(%arg0: i32) -> (i32, i32) {
    %c0_i32 = arith.constant 0 : i32
    %c0_i32_0 = arith.constant 0 : i32
    %c0_i32_1 = arith.constant 0 : i32
    return %c0_i32, %c0_i32_0 : i32, i32
  }
  func.func @transform_7(%arg0: i32) -> (i32, i32) {
    %c0_i32 = arith.constant 0 : i32
    %c0_i32_0 = arith.constant 0 : i32
    %c0_i32_1 = arith.constant 0 : i32
    return %c0_i32, %c0_i32_0 : i32, i32
  }
  func.func @transform_8(%arg0: i32) -> (i32, i32) {
    %c0_i32 = arith.constant 0 : i32
    %c0_i32_0 = arith.constant 0 : i32
    %c0_i32_1 = arith.constant 0 : i32
    return %c0_i32, %c0_i32_0 : i32, i32
  }
  func.func @transform_9(%arg0: i32) -> (i32, i32) {
    %c0_i32 = arith.constant 0 : i32
    %c0_i32_0 = arith.constant 0 : i32
    %c0_i32_1 = arith.constant 0 : i32
    return %c0_i32, %c0_i32_0 : i32, i32
  }
  func.func @transform_10(%arg0: i32) -> (i32, i32) {
    %c0_i32 = arith.constant 0 : i32
    %c0_i32_0 = arith.constant 0 : i32
    %c0_i32_1 = arith.constant 0 : i32
    return %c0_i32, %c0_i32_0 : i32, i32
  }
  func.func @transform_11(%arg0: i32) -> (i32, i32, i32) {
    %c0_i32 = arith.constant 0 : i32
    %c0_i32_0 = arith.constant 0 : i32
    %c0_i32_1 = arith.constant 0 : i32
    return %arg0, %c0_i32, %c0_i32_0 : i32, i32, i32
  }
}

</mosaic_0001>

<llo_original>
// kernel: tpu_custom_call.1
$region0: #{tpu_custom_call.1}
  #allocation0 [shape = 'u32[]', space=smem, size = 0x4, offset = 0x4, fixed_abs, tag = 'smem constant byte address 0x4 - core index']
  #allocation1 [shape = 'u32[144,128]{1,0:T(1,128)}', space=vmem, size = 0x12000, scoped, tag = 'internal scratch']
  #allocation2 [shape = 'f32[1,1]{1,0:T(1,128)S(1)}', space=vmem, size = 0x200, scoped, tag = 'scoped memory for tpu_custom_call.1']
  %s0 = inlined_call_operand.hbm [shape: f32[4,16,16], index: 0, kind: input, shape index: {}]
  %s1 = inlined_call_operand.hbm [shape: f32[4,2,16], index: 1, kind: input, shape index: {}]
  %s2 = inlined_call_operand.hbm [shape: f32[16,32], index: 2, kind: input, shape index: {}]
  %s3 = inlined_call_operand.vmem [shape: f32[1,32], index: 3, kind: input, shape index: {}]
  %s4 = inlined_call_operand.hbm [shape: f32[16,32], index: 4, kind: input, shape index: {}]
  %s5 = inlined_call_operand.vmem [shape: f32[1,32], index: 5, kind: input, shape index: {}]
  %s6 = inlined_call_operand.hbm [shape: f32[32,512], index: 6, kind: input, shape index: {}]
  %s7 = inlined_call_operand.hbm [shape: f32[32,512], index: 7, kind: input, shape index: {}]
  %s8 = inlined_call_operand.vmem [shape: f32[1,512], index: 8, kind: input, shape index: {}]
  %s9 = inlined_call_operand.vmem [shape: f32[1,512], index: 9, kind: input, shape index: {}]
  %s10 = inlined_call_operand.<no memory space> [shape: f32[1,1], index: 10, kind: input, shape index: {}]
  %s11 = inlined_call_operand.hbm [shape: f32[4,2,8], index: 11, kind: output, shape index: {}]
  %s12 = sld [smem:[#allocation0]]
  $region101: #{tpu_custom_call.1} parent=0
    _
  %s14 = ssub.s32 1, %s12
  %s15 = scalar_select 0, %s14, %s12
  %v16 = vstv %s10
  %17 = vst [vmem:[#allocation2] sm:$0x1] %v16
  $region1: #{tpu_custom_call.1} parent=0
    #allocation3 [shape = 'u8[16384]{0}', space=vmem, size = 0x4000, scoped, tag = 'input window, operand 0']
    #allocation4 [shape = 's32[2]{0}', space=sflag, size = 0x8, scoped, tag = 'scoped memory for tpu_custom_call.1']
    #allocation5 [shape = 's32[2]{0}', space=sflag, size = 0x8, scoped, tag = 'scoped memory for tpu_custom_call.1']
    #allocation6 [shape = 'u8[2048]{0}', space=vmem, size = 0x800, scoped, tag = 'input window, operand 1']
    #allocation7 [shape = 's32[2]{0}', space=sflag, size = 0x8, scoped, tag = 'scoped memory for tpu_custom_call.1']
    #allocation8 [shape = 'u8[8192]{0}', space=vmem, size = 0x2000, scoped, tag = 'input window, operand 2, single buffered']
    #allocation9 [shape = 'u8[8192]{0}', space=vmem, size = 0x2000, scoped, tag = 'input window, operand 4, single buffered']
    #allocation10 [shape = 's32[1]{0}', space=sflag, size = 0x4, scoped, tag = 'scoped memory for tpu_custom_call.1']
    #allocation11 [shape = 'u8[65536]{0}', space=vmem, size = 0x10000, scoped, tag = 'input window, operand 6, single buffered']
    #allocation12 [shape = 'u8[65536]{0}', space=vmem, size = 0x10000, scoped, tag = 'input window, operand 7, single buffered']
    #allocation13 [shape = 's32[1]{0}', space=sflag, size = 0x4, scoped, tag = 'scoped memory for tpu_custom_call.1']
    #allocation14 [shape = 'u8[2048]{0}', space=vmem, size = 0x800, scoped, tag = 'output window, operand 0']
    %18 = vsyncpa [#allocation4], 0
    %s19 = scalar_lea.sflag [#allocation4], 1
    %20 = vsyncpa %s19, 0
    %21 = vsyncpa [#allocation7], 0
    %s22 = scalar_lea.sflag [#allocation7], 1
    %23 = vsyncpa %s22, 0
    %24 = vsyncpa [#allocation10], 0
    %25 = vsyncpa [#allocation13], 0
    %26 = vsyncpa [#allocation5], 0
    %s27 = scalar_lea.sflag [#allocation5], 1
    %28 = vsyncpa %s27, 0
    loop: start=0, step=1, limit=6
    $region2: #{tpu_custom_call.1} parent=1 // loop_pre_header
      _
    $region3: #{tpu_custom_call.1} parent=1 // loop_header
      %s30 = sphi 0, %s34
      %p31 = scmp.ge.s32.totalorder %s30, 6
      %s40 = sphi 0, %s42
      %s43 = sphi 0, %s40
      %s44 = sphi 0, %s43
      %s60 = sphi 0, %s44
      %s66 = sphi 0, %s68
      %s69 = sphi 0, %s66
      %s70 = sphi 0, %s69
      %s86 = sphi 0, %s70
      %s90 = sphi 0, %s90
      %s92 = sphi 0, %s90
      %s93 = sphi 0, %s92
      %s107 = sphi 0, %s93
      %s111 = sphi 0, %s111
      %s113 = sphi 0, %s111
      %s114 = sphi 0, %s113
      %s128 = sphi 0, %s114
      %s132 = sphi 0, %s132
      %s134 = sphi 0, %s132
      %s135 = sphi 0, %s134
      %s149 = sphi 0, %s135
      %s153 = sphi 0, %s153
      %s155 = sphi 0, %s153
      %s156 = sphi 0, %s155
      %s170 = sphi 0, %s156
      %s174 = sphi 0, %s174
      %s176 = sphi 0, %s174
      %s177 = sphi 0, %s176
      %s191 = sphi 0, %s177
      %s195 = sphi 0, %s195
      %s197 = sphi 0, %s195
      %s198 = sphi 0, %s197
      %s212 = sphi 0, %s198
      %s216 = sphi 0, %s216
      %s218 = sphi 0, %s216
      %s219 = sphi 0, %s218
      %s233 = sphi 0, %s219
      %s237 = sphi 0, %s237
      %s239 = sphi 0, %s237
      %s240 = sphi 0, %s239
      %s254 = sphi 0, %s240
      %s258 = sphi 0, %s258
      %s260 = sphi 0, %s258
      %s261 = sphi 0, %s260
      %s275 = sphi 0, %s261
      %s281 = sphi 0, %s283
      %s284 = sphi 0, %s281
      %s285 = sphi 0, %s284
      %s301 = sphi 0, %s285
    $region4: #{tpu_custom_call.1} parent=1 // loop_header_branch
      %33 = sbr.rel (%p31) target = $region8
    $region5: #{tpu_custom_call.1} parent=1 // loop_body
      %s35 = ssub.s32 %s30, 1
      %s36 = ssub.s32 %s30, 2
      %s37 = sadd.s32 %s30, 1
      %s38 = ssub.s32 %s30, %s37
      %p39 = scmp.eq.s32.totalorder %s38, 0
      %s41 = sadd.s32 %s40, 1
      %s42 = scalar_select %p39, %s40, %s41
      %p45 = pneg %p39
      %p46 = scmp.eq.s32.totalorder %s30, 3
      %p47 = por %p45, %p46
      %p48 = scmp.ne.s32.totalorder %s40, %s43
      %p49 = scmp.eq.s32.totalorder %s30, 0
      %p50 = por %p48, %p49
      %p51 = scmp.ne.s32.totalorder %s40, %s43
      %p52 = scmp.eq.s32.totalorder %s35, 3
      %p53 = por %p51, %p52
      %p54 = scmp.ne.s32.totalorder %s43, %s44
      %p55 = scmp.eq.s32.totalorder %s35, 0
      %p56 = por %p54, %p55
      %p57 = scmp.ne.s32.totalorder %s43, %s44
      %p58 = scmp.eq.s32.totalorder %s36, 3
      %p59 = por %p57, %p58
      %p61 = scmp.ne.s32.totalorder %s44, %s60
      %p62 = scmp.eq.s32.totalorder %s36, 0
      %p63 = por %p61, %p62
      %s64 = ssub.s32 %s30, %s37
      %p65 = scmp.eq.s32.totalorder %s64, 0
      %s67 = sadd.s32 %s66, 1
      %s68 = scalar_select %p65, %s66, %s67
      %p71 = pneg %p65
      %p72 = scmp.eq.s32.totalorder %s30, 3
      %p73 = por %p71, %p72
      %p74 = scmp.ne.s32.totalorder %s66, %s69
      %p75 = scmp.eq.s32.totalorder %s30, 0
      %p76 = por %p74, %p75
      %p77 = scmp.ne.s32.totalorder %s66, %s69
      %p78 = scmp.eq.s32.totalorder %s35, 3
      %p79 = por %p77, %p78
      %p80 = scmp.ne.s32.totalorder %s69, %s70
      %p81 = scmp.eq.s32.totalorder %s35, 0
      %p82 = por %p80, %p81
      %p83 = scmp.ne.s32.totalorder %s69, %s70
      %p84 = scmp.eq.s32.totalorder %s36, 3
      %p85 = por %p83, %p84
      %p87 = scmp.ne.s32.totalorder %s70, %s86
      %p88 = scmp.eq.s32.totalorder %s36, 0
      %p89 = por %p87, %p88
      %s91 = sadd.s32 %s90, 1
      %p94 = scmp.eq.s32.totalorder %s30, 3
      %p95 = scmp.ne.s32.totalorder %s90, %s92
      %p96 = scmp.eq.s32.totalorder %s30, 0
      %p97 = por %p95, %p96
      %p98 = scmp.ne.s32.totalorder %s90, %s92
      %p99 = scmp.eq.s32.totalorder %s35, 3
      %p100 = por %p98, %p99
      %p101 = scmp.ne.s32.totalorder %s92, %s93
      %p102 = scmp.eq.s32.totalorder %s35, 0
      %p103 = por %p101, %p102
      %p104 = scmp.ne.s32.totalorder %s92, %s93
      %p105 = scmp.eq.s32.totalorder %s36, 3
      %p106 = por %p104, %p105
      %p108 = scmp.ne.s32.totalorder %s93, %s107
      %p109 = scmp.eq.s32.totalorder %s36, 0
      %p110 = por %p108, %p109
      %s112 = sadd.s32 %s111, 1
      %p115 = scmp.eq.s32.totalorder %s30, 3
      %p116 = scmp.ne.s32.totalorder %s111, %s113
      %p117 = scmp.eq.s32.totalorder %s30, 0
      %p118 = por %p116, %p117
      %p119 = scmp.ne.s32.totalorder %s111, %s113
      %p120 = scmp.eq.s32.totalorder %s35, 3
      %p121 = por %p119, %p120
      %p122 = scmp.ne.s32.totalorder %s113, %s114
      %p123 = scmp.eq.s32.totalorder %s35, 0
      %p124 = por %p122, %p123
      %p125 = scmp.ne.s32.totalorder %s113, %s114
      %p126 = scmp.eq.s32.totalorder %s36, 3
      %p127 = por %p125, %p126
      %p129 = scmp.ne.s32.totalorder %s114, %s128
      %p130 = scmp.eq.s32.totalorder %s36, 0
      %p131 = por %p129, %p130
      %s133 = sadd.s32 %s132, 1
      %p136 = scmp.eq.s32.totalorder %s30, 3
      %p137 = scmp.ne.s32.totalorder %s132, %s134
      %p138 = scmp.eq.s32.totalorder %s30, 0
      %p139 = por %p137, %p138
      %p140 = scmp.ne.s32.totalorder %s132, %s134
      %p141 = scmp.eq.s32.totalorder %s35, 3
      %p142 = por %p140, %p141
      %p143 = scmp.ne.s32.totalorder %s134, %s135
      %p144 = scmp.eq.s32.totalorder %s35, 0
      %p145 = por %p143, %p144
      %p146 = scmp.ne.s32.totalorder %s134, %s135
      %p147 = scmp.eq.s32.totalorder %s36, 3
      %p148 = por %p146, %p147
      %p150 = scmp.ne.s32.totalorder %s135, %s149
      %p151 = scmp.eq.s32.totalorder %s36, 0
      %p152 = por %p150, %p151
      %s154 = sadd.s32 %s153, 1
      %p157 = scmp.eq.s32.totalorder %s30, 3
      %p158 = scmp.ne.s32.totalorder %s153, %s155
      %p159 = scmp.eq.s32.totalorder %s30, 0
      %p160 = por %p158, %p159
      %p161 = scmp.ne.s32.totalorder %s153, %s155
      %p162 = scmp.eq.s32.totalorder %s35, 3
      %p163 = por %p161, %p162
      %p164 = scmp.ne.s32.totalorder %s155, %s156
      %p165 = scmp.eq.s32.totalorder %s35, 0
      %p166 = por %p164, %p165
      %p167 = scmp.ne.s32.totalorder %s155, %s156
      %p168 = scmp.eq.s32.totalorder %s36, 3
      %p169 = por %p167, %p168
      %p171 = scmp.ne.s32.totalorder %s156, %s170
      %p172 = scmp.eq.s32.totalorder %s36, 0
      %p173 = por %p171, %p172
      %s175 = sadd.s32 %s174, 1
      %p178 = scmp.eq.s32.totalorder %s30, 3
      %p179 = scmp.ne.s32.totalorder %s174, %s176
      %p180 = scmp.eq.s32.totalorder %s30, 0
      %p181 = por %p179, %p180
      %p182 = scmp.ne.s32.totalorder %s174, %s176
      %p183 = scmp.eq.s32.totalorder %s35, 3
      %p184 = por %p182, %p183
      %p185 = scmp.ne.s32.totalorder %s176, %s177
      %p186 = scmp.eq.s32.totalorder %s35, 0
      %p187 = por %p185, %p186
      %p188 = scmp.ne.s32.totalorder %s176, %s177
      %p189 = scmp.eq.s32.totalorder %s36, 3
      %p190 = por %p188, %p189
      %p192 = scmp.ne.s32.totalorder %s177, %s191
      %p193 = scmp.eq.s32.totalorder %s36, 0
      %p194 = por %p192, %p193
      %s196 = sadd.s32 %s195, 1
      %p199 = scmp.eq.s32.totalorder %s30, 3
      %p200 = scmp.ne.s32.totalorder %s195, %s197
      %p201 = scmp.eq.s32.totalorder %s30, 0
      %p202 = por %p200, %p201
      %p203 = scmp.ne.s32.totalorder %s195, %s197
      %p204 = scmp.eq.s32.totalorder %s35, 3
      %p205 = por %p203, %p204
      %p206 = scmp.ne.s32.totalorder %s197, %s198
      %p207 = scmp.eq.s32.totalorder %s35, 0
      %p208 = por %p206, %p207
      %p209 = scmp.ne.s32.totalorder %s197, %s198
      %p210 = scmp.eq.s32.totalorder %s36, 3
      %p211 = por %p209, %p210
      %p213 = scmp.ne.s32.totalorder %s198, %s212
      %p214 = scmp.eq.s32.totalorder %s36, 0
      %p215 = por %p213, %p214
      %s217 = sadd.s32 %s216, 1
      %p220 = scmp.eq.s32.totalorder %s30, 3
      %p221 = scmp.ne.s32.totalorder %s216, %s218
      %p222 = scmp.eq.s32.totalorder %s30, 0
      %p223 = por %p221, %p222
      %p224 = scmp.ne.s32.totalorder %s216, %s218
      %p225 = scmp.eq.s32.totalorder %s35, 3
      %p226 = por %p224, %p225
      %p227 = scmp.ne.s32.totalorder %s218, %s219
      %p228 = scmp.eq.s32.totalorder %s35, 0
      %p229 = por %p227, %p228
      %p230 = scmp.ne.s32.totalorder %s218, %s219
      %p231 = scmp.eq.s32.totalorder %s36, 3
      %p232 = por %p230, %p231
      %p234 = scmp.ne.s32.totalorder %s219, %s233
      %p235 = scmp.eq.s32.totalorder %s36, 0
      %p236 = por %p234, %p235
      %s238 = sadd.s32 %s237, 1
      %p241 = scmp.eq.s32.totalorder %s30, 3
      %p242 = scmp.ne.s32.totalorder %s237, %s239
      %p243 = scmp.eq.s32.totalorder %s30, 0
      %p244 = por %p242, %p243
      %p245 = scmp.ne.s32.totalorder %s237, %s239
      %p246 = scmp.eq.s32.totalorder %s35, 3
      %p247 = por %p245, %p246
      %p248 = scmp.ne.s32.totalorder %s239, %s240
      %p249 = scmp.eq.s32.totalorder %s35, 0
      %p250 = por %p248, %p249
      %p251 = scmp.ne.s32.totalorder %s239, %s240
      %p252 = scmp.eq.s32.totalorder %s36, 3
      %p253 = por %p251, %p252
      %p255 = scmp.ne.s32.totalorder %s240, %s254
      %p256 = scmp.eq.s32.totalorder %s36, 0
      %p257 = por %p255, %p256
      %s259 = sadd.s32 %s258, 1
      %p262 = scmp.eq.s32.totalorder %s30, 3
      %p263 = scmp.ne.s32.totalorder %s258, %s260
      %p264 = scmp.eq.s32.totalorder %s30, 0
      %p265 = por %p263, %p264
      %p266 = scmp.ne.s32.totalorder %s258, %s260
      %p267 = scmp.eq.s32.totalorder %s35, 3
      %p268 = por %p266, %p267
      %p269 = scmp.ne.s32.totalorder %s260, %s261
      %p270 = scmp.eq.s32.totalorder %s35, 0
      %p271 = por %p269, %p270
      %p272 = scmp.ne.s32.totalorder %s260, %s261
      %p273 = scmp.eq.s32.totalorder %s36, 3
      %p274 = por %p272, %p273
      %p276 = scmp.ne.s32.totalorder %s261, %s275
      %p277 = scmp.eq.s32.totalorder %s36, 0
      %p278 = por %p276, %p277
      %s279 = ssub.s32 %s30, %s37
      %p280 = scmp.eq.s32.totalorder %s279, 0
      %s282 = sadd.s32 %s281, 1
      %s283 = scalar_select %p280, %s281, %s282
      %p286 = pneg %p280
      %p287 = scmp.eq.s32.totalorder %s30, 3
      %p288 = por %p286, %p287
      %p289 = scmp.ne.s32.totalorder %s281, %s284
      %p290 = scmp.eq.s32.totalorder %s30, 0
      %p291 = por %p289, %p290
      %p292 = scmp.ne.s32.totalorder %s281, %s284
      %p293 = scmp.eq.s32.totalorder %s35, 3
      %p294 = por %p292, %p293
      %p295 = scmp.ne.s32.totalorder %s284, %s285
      %p296 = scmp.eq.s32.totalorder %s35, 0
      %p297 = por %p295, %p296
      %p298 = scmp.ne.s32.totalorder %s284, %s285
      %p299 = scmp.eq.s32.totalorder %s36, 3
      %p300 = por %p298, %p299
      %p302 = scmp.ne.s32.totalorder %s285, %s301
      %p303 = scmp.eq.s32.totalorder %s36, 0
      %p304 = por %p302, %p303
      %p305 = scmp.le.s32.totalorder 1, %s30
      %p306 = scmp.lt.s32.totalorder %s30, 5
      %p307 = pnand %p305, %p306
      %p308 = pneg %p307
      // Predicated region
      $region9: #{tpu_custom_call.1} parent=5 // pred_check
        _
      $region10: #{tpu_custom_call.1} parent=5 // pred_check_branch
        %310 = sbr.rel (%p307) target = $region12
      $region11: #{tpu_custom_call.1} parent=5 // pred_region
        %s311 = ssub.s32 %s30, 1
        // Predicated region
        $region13: #{tpu_custom_call.1} parent=11 // pred_check
          %p312 = pneg %p103
        $region14: #{tpu_custom_call.1} parent=11 // pred_check_branch
          %314 = sbr.rel (%p312) target = $region16
        $region15: #{tpu_custom_call.1} parent=11 // pred_region
          %s316 = ssub.s32 256, 256
          %317 = vsyncadd [#allocation7], %s316
          %s318 = sshll.u32 [#allocation8], 4
          %s319 = int_to_ptr.vmem [resolvable:$true] %s318
          %324 = dma.hbm_to_vmem [thread:$0]  %s2, 256, %s319, [#allocation7], 128, 128, 8
        $region16: #{tpu_custom_call.1} parent=11 // pred_fallthru
          _
        // Predicated region
        $region17: #{tpu_custom_call.1} parent=11 // pred_check
          %p325 = pneg %p124
        $region18: #{tpu_custom_call.1} parent=11 // pred_check_branch
          %327 = sbr.rel (%p325) target = $region20
        $region19: #{tpu_custom_call.1} parent=11 // pred_region
          _
        $region20: #{tpu_custom_call.1} parent=11 // pred_fallthru
          _
        // Predicated region
        $region21: #{tpu_custom_call.1} parent=11 // pred_check
          %p328 = pneg %p145
        $region22: #{tpu_custom_call.1} parent=11 // pred_check_branch
          %330 = sbr.rel (%p328) target = $region24
        $region23: #{tpu_custom_call.1} parent=11 // pred_region
          %s332 = ssub.s32 256, 256
          %333 = vsyncadd [#allocation10], %s332
          %s334 = sshll.u32 [#allocation9], 4
          %s335 = int_to_ptr.vmem [resolvable:$true] %s334
          %340 = dma.hbm_to_vmem [thread:$0]  %s4, 256, %s335, [#allocation10], 128, 128, 8
        $region24: #{tpu_custom_call.1} parent=11 // pred_fallthru
          _
        // Predicated region
        $region25: #{tpu_custom_call.1} parent=11 // pred_check
          %p341 = pneg %p166
        $region26: #{tpu_custom_call.1} parent=11 // pred_check_branch
          %343 = sbr.rel (%p341) target = $region28
        $region27: #{tpu_custom_call.1} parent=11 // pred_region
          _
        $region28: #{tpu_custom_call.1} parent=11 // pred_fallthru
          _
        // Predicated region
        $region29: #{tpu_custom_call.1} parent=11 // pred_check
          %p344 = pneg %p187
        $region30: #{tpu_custom_call.1} parent=11 // pred_check_branch
          %346 = sbr.rel (%p344) target = $region32
        $region31: #{tpu_custom_call.1} parent=11 // pred_region
          %s348 = ssub.s32 2048, 2048
          %349 = vsyncadd [#allocation10], %s348
          %s350 = sshll.u32 [#allocation11], 4
          %s351 = int_to_ptr.vmem [resolvable:$true] %s350
          %356 = dma.hbm_to_vmem [thread:$0]  %s6, 2048, %s351, [#allocation10], 512, 512, 32
        $region32: #{tpu_custom_call.1} parent=11 // pred_fallthru
          _
        // Predicated region
        $region33: #{tpu_custom_call.1} parent=11 // pred_check
          %p357 = pneg %p208
        $region34: #{tpu_custom_call.1} parent=11 // pred_check_branch
          %359 = sbr.rel (%p357) target = $region36
        $region35: #{tpu_custom_call.1} parent=11 // pred_region
          %s361 = ssub.s32 2048, 2048
          %362 = vsyncadd [#allocation13], %s361
          %s363 = sshll.u32 [#allocation12], 4
          %s364 = int_to_ptr.vmem [resolvable:$true] %s363
          %369 = dma.hbm_to_vmem [thread:$0]  %s7, 2048, %s364, [#allocation13], 512, 512, 32
        $region36: #{tpu_custom_call.1} parent=11 // pred_fallthru
          _
        // Predicated region
        $region37: #{tpu_custom_call.1} parent=11 // pred_check
          %p370 = pneg %p229
        $region38: #{tpu_custom_call.1} parent=11 // pred_check_branch
          %372 = sbr.rel (%p370) target = $region40
        $region39: #{tpu_custom_call.1} parent=11 // pred_region
          _
        $region40: #{tpu_custom_call.1} parent=11 // pred_fallthru
          _
        // Predicated region
        $region41: #{tpu_custom_call.1} parent=11 // pred_check
          %p373 = pneg %p250
        $region42: #{tpu_custom_call.1} parent=11 // pred_check_branch
          %375 = sbr.rel (%p373) target = $region44
        $region43: #{tpu_custom_call.1} parent=11 // pred_region
          _
        $region44: #{tpu_custom_call.1} parent=11 // pred_fallthru
          _
        // Predicated region
        $region45: #{tpu_custom_call.1} parent=11 // pred_check
          %p376 = pneg %p271
        $region46: #{tpu_custom_call.1} parent=11 // pred_check_branch
          %378 = sbr.rel (%p376) target = $region48
        $region47: #{tpu_custom_call.1} parent=11 // pred_region
          _
        $region48: #{tpu_custom_call.1} parent=11 // pred_fallthru
          _
      $region12: #{tpu_custom_call.1} parent=5 // pred_fallthru
        _
      %p379 = scmp.lt.s32.totalorder %s30, 4
      // Predicated region
      $region49: #{tpu_custom_call.1} parent=5 // pred_check
        %p380 = pneg %p379
      $region50: #{tpu_custom_call.1} parent=5 // pred_check_branch
        %382 = sbr.rel (%p380) target = $region52
      $region51: #{tpu_custom_call.1} parent=5 // pred_region
        // Predicated region
        $region53: #{tpu_custom_call.1} parent=51 // pred_check
          %p383 = pneg %p50
        $region54: #{tpu_custom_call.1} parent=51 // pred_check_branch
          %385 = sbr.rel (%p383) target = $region56
        $region55: #{tpu_custom_call.1} parent=51 // pred_region
          %s386 = sand.u32 %s40, 1
          %s387 = scalar_lea.sflag [#allocation4], %s386
          %s388 = sand.u32 %s40, 1
          %s389 = smul.addr %s388, 16
          %s390 = scalar_lea.vmem [#allocation3], %s389
          %s392 = ssub.s32 256, 256
          %393 = vsyncadd %s387, %s392
          %s394 = smul.addr %s30, 2
          %s395 = smul.addr %s394, 128
          %s396 = scalar_lea.hbm %s0, %s395
          %s397 = sshll.u32 %s390, 4
          %s398 = int_to_ptr.vmem [resolvable:$true] %s397
          %403 = dma.hbm_to_vmem [thread:$0]  %s396, 256, %s398, %s387, 128, 128, 8
        $region56: #{tpu_custom_call.1} parent=51 // pred_fallthru
          _
        // Predicated region
        $region57: #{tpu_custom_call.1} parent=51 // pred_check
          %p404 = pneg %p76
        $region58: #{tpu_custom_call.1} parent=51 // pred_check_branch
          %406 = sbr.rel (%p404) target = $region60
        $region59: #{tpu_custom_call.1} parent=51 // pred_region
          %s407 = sand.u32 %s30, 1
          %s408 = scalar_lea.sflag [#allocation7], %s407
          %s409 = sand.u32 %s66, 1
          %s410 = smul.addr %s409, 2
          %s411 = scalar_lea.vmem [#allocation6], %s410
          %s413 = ssub.s32 32, 32
          %414 = vsyncadd %s408, %s413
          %s415 = smul.addr %s30, 32
          %s416 = scalar_lea.hbm %s1, %s415
          %s418 = sshll.u32 %s411, 4
          %s419 = int_to_ptr.vmem [resolvable:$true] %s418
          %421 = dma.hbm_to_vmem [thread:$0]  %s416, 32, %s419, %s408
        $region60: #{tpu_custom_call.1} parent=51 // pred_fallthru
          _
      $region52: #{tpu_custom_call.1} parent=5 // pred_fallthru
        _
      %p422 = scmp.le.s32.totalorder 1, %s30
      %p423 = scmp.lt.s32.totalorder %s30, 5
      %p424 = pnand %p422, %p423
      %p425 = pneg %p424
      // Predicated region
      $region61: #{tpu_custom_call.1} parent=5 // pred_check
        _
      $region62: #{tpu_custom_call.1} parent=5 // pred_check_branch
        %427 = sbr.rel (%p424) target = $region64
      $region63: #{tpu_custom_call.1} parent=5 // pred_region
        %s428 = ssub.s32 %s30, 1
        %s429 = sand.u32 %s43, 1
        %s430 = scalar_lea.sflag [#allocation4], %s429
        %s431 = sand.u32 %s43, 1
        %s432 = smul.addr %s431, 16
        %s433 = scalar_lea.vmem [#allocation3], %s432
        // Predicated region
        $region65: #{tpu_custom_call.1} parent=63 // pred_check
          %p434 = pneg %p56
        $region66: #{tpu_custom_call.1} parent=63 // pred_check_branch
          %436 = sbr.rel (%p434) target = $region68
        $region67: #{tpu_custom_call.1} parent=63 // pred_region
          %437 = dma.done %s430, 256
        $region68: #{tpu_custom_call.1} parent=63 // pred_fallthru
          _
        %s438 = sand.u32 %s35, 1
        %s439 = scalar_lea.sflag [#allocation7], %s438
        %s440 = sand.u32 %s69, 1
        %s441 = smul.addr %s440, 2
        %s442 = scalar_lea.vmem [#allocation6], %s441
        // Predicated region
        $region69: #{tpu_custom_call.1} parent=63 // pred_check
          %p443 = pneg %p82
        $region70: #{tpu_custom_call.1} parent=63 // pred_check_branch
          %445 = sbr.rel (%p443) target = $region72
        $region71: #{tpu_custom_call.1} parent=63 // pred_region
          %446 = dma.done %s439, 32
        $region72: #{tpu_custom_call.1} parent=63 // pred_fallthru
          _
        // Predicated region
        $region73: #{tpu_custom_call.1} parent=63 // pred_check
          %p447 = pneg %p103
        $region74: #{tpu_custom_call.1} parent=63 // pred_check_branch
          %449 = sbr.rel (%p447) target = $region76
        $region75: #{tpu_custom_call.1} parent=63 // pred_region
          %450 = dma.done [#allocation7], 256
        $region76: #{tpu_custom_call.1} parent=63 // pred_fallthru
          _
        // Predicated region
        $region77: #{tpu_custom_call.1} parent=63 // pred_check
          %p451 = pneg %p145
        $region78: #{tpu_custom_call.1} parent=63 // pred_check_branch
          %453 = sbr.rel (%p451) target = $region80
        $region79: #{tpu_custom_call.1} parent=63 // pred_region
          %454 = dma.done [#allocation10], 256
        $region80: #{tpu_custom_call.1} parent=63 // pred_fallthru
          _
        // Predicated region
        $region81: #{tpu_custom_call.1} parent=63 // pred_check
          %p455 = pneg %p187
        $region82: #{tpu_custom_call.1} parent=63 // pred_check_branch
          %457 = sbr.rel (%p455) target = $region84
        $region83: #{tpu_custom_call.1} parent=63 // pred_region
          %458 = dma.done [#allocation10], 2048
        $region84: #{tpu_custom_call.1} parent=63 // pred_fallthru
          _
        // Predicated region
        $region85: #{tpu_custom_call.1} parent=63 // pred_check
          %p459 = pneg %p208
        $region86: #{tpu_custom_call.1} parent=63 // pred_check_branch
          %461 = sbr.rel (%p459) target = $region88
        $region87: #{tpu_custom_call.1} parent=63 // pred_region
          %462 = dma.done [#allocation13], 2048
        $region88: #{tpu_custom_call.1} parent=63 // pred_fallthru
          _
        %s463 = sand.u32 %s43, 1
        %s464 = scalar_lea.sflag [#allocation4], %s463
        %s465 = sand.u32 %s43, 1
        %s466 = smul.addr %s465, 16
        %s467 = scalar_lea.vmem [#allocation3], %s466
        %p468 = pneg %p56
        %p469 = pneg %p53
        %s470 = sand.u32 %s35, 1
        %s471 = scalar_lea.sflag [#allocation7], %s470
        %s472 = sand.u32 %s69, 1
        %s473 = smul.addr %s472, 2
        %s474 = scalar_lea.vmem [#allocation6], %s473
        %p475 = pneg %p82
        %p476 = pneg %p79
        %p477 = pneg %p103
        %p478 = pneg %p100
        %p479 = pneg %p124
        %p480 = pneg %p121
        %p481 = pneg %p145
        %p482 = pneg %p142
        %p483 = pneg %p166
        %p484 = pneg %p163
        %p485 = pneg %p187
        %p486 = pneg %p184
        %p487 = pneg %p208
        %p488 = pneg %p205
        %p489 = pneg %p229
        %p490 = pneg %p226
        %p491 = pneg %p250
        %p492 = pneg %p247
        %p493 = pneg %p271
        %p494 = pneg %p268
        %p495 = pneg %p297
        %p496 = pneg %p294
        %s497 = sand.u32 %s284, 1
        %s498 = scalar_lea.sflag [#allocation5], %s497
        %s499 = sand.u32 %s284, 1
        %s500 = smul.addr %s499, 2
        %s501 = scalar_lea.vmem [#allocation14], %s500
        %v502 = vld [vmem:[%s433] sm:$0xff]
        %v503 = vld [vmem:[%s433 + $0x8] sm:$0xff]
        %v504 = vld [vmem:[#allocation8] sm:$0xff]
        %v505 = vld [vmem:[#allocation8 + $0x8] sm:$0xff]
        %v506 = vld [vmem:[%s3] sm:$0x1]
        %v508 = vlaneseq
        %v509 = vshrl.u32 %v508, 7
        %v510 = vsub.s32 0, %v509
        %v511 = vrot.slane %v506, %v510
        %vm513 = vcmask 130048
        %v515 = vsel %vm513, %v502, 0
        %v518 = vsel %vm513, %v503, 0
        %520 = vmatprep.subr.mxu0 0.0
        %521 = vmatpush1.msra.mxu0 0.0
        %522 = vmatprep.subr.mxu0 0.0
        %523 = vmatpush1.msra.mxu0 0.0
        %524 = vmatprep.subr.mxu0 0.0
        %525 = vmatpush1.msra.mxu0 0.0
        %526 = vmatprep.subr.mxu0 0.0
        %527 = vmatpush1.msra.mxu0 0.0
        %528 = vmatprep.subr.mxu0 0.0
        %529 = vmatpush1.msra.mxu0 0.0
        %530 = vmatprep.subr.mxu0 0.0
        %531 = vmatpush1.msra.mxu0 0.0
        %532 = vmatprep.subr.mxu0 0.0
        %533 = vmatpush1.msra.mxu0 0.0
        %534 = vmatprep.subr.mxu0 0.0
        %535 = vmatpush1.msra.mxu0 0.0
        %536 = vmatprep.subr.mxu0 0.0
        %537 = vmatpush1.msra.mxu0 0.0
        %538 = vmatprep.subr.mxu0 0.0
        %539 = vmatpush1.msra.mxu0 0.0
        %540 = vmatprep.subr.mxu0 0.0
        %541 = vmatpush1.msra.mxu0 0.0
        %542 = vmatprep.subr.mxu0 0.0
        %543 = vmatpush1.msra.mxu0 0.0
        %544 = vmatprep.subr.mxu0 0.0
        %545 = vmatpush1.msra.mxu0 0.0
        %546 = vmatprep.subr.mxu0 0.0
        %547 = vmatpush1.msra.mxu0 0.0
        %548 = vmatprep.subr.mxu0 0.0
        %549 = vmatpush1.msra.mxu0 %v505
        %550 = vmatprep.subr.mxu0 0.0
        %551 = vmatpush1.msra.mxu0 %v504
        %552 = vmatprep.subr.mxu0 0.0
        %553 = vmatpush2.msra.mxu0 0.0
        %554 = vmatprep.subr.mxu0 0.0
        %555 = vmatpush2.msra.mxu0 0.0
        %556 = vmatprep.subr.mxu0 0.0
        %557 = vmatpush2.msra.mxu0 0.0
        %558 = vmatprep.subr.mxu0 0.0
        %559 = vmatpush2.msra.mxu0 0.0
        %560 = vmatprep.subr.mxu0 0.0
        %561 = vmatpush2.msra.mxu0 0.0
        %562 = vmatprep.subr.mxu0 0.0
        %563 = vmatpush2.msra.mxu0 0.0
        %564 = vmatprep.subr.mxu0 0.0
        %565 = vmatpush2.msra.mxu0 0.0
        %566 = vmatprep.subr.mxu0 0.0
        %567 = vmatpush2.msra.mxu0 0.0
        %568 = vmatprep.subr.mxu0 0.0
        %569 = vmatpush2.msra.mxu0 0.0
        %570 = vmatprep.subr.mxu0 0.0
        %571 = vmatpush2.msra.mxu0 0.0
        %572 = vmatprep.subr.mxu0 0.0
        %573 = vmatpush2.msra.mxu0 0.0
        %574 = vmatprep.subr.mxu0 0.0
        %575 = vmatpush2.msra.mxu0 0.0
        %576 = vmatprep.subr.mxu0 0.0
        %577 = vmatpush2.msra.mxu0 0.0
        %578 = vmatprep.subr.mxu0 0.0
        %579 = vmatpush2.msra.mxu0 0.0
        %580 = vmatprep.subr.mxu0 0.0
        %581 = vmatpush2.msra.mxu0 0.0
        %582 = vmatprep.subr.mxu0 0.0
        %583 = vmatpush2.msra.mxu0 0.0
        %584 = vmatprep.mubr.f32.mxu0 0.0
        %585 = vmatmul.mubr.f32.gmra.mxu0 %v515
        %v586 = vpop.f32.mrf.mxu0
        %v587 = vadd.f32 %v511, %v586
        %v588 = vpop.f32.mrf.mxu0
        %589 = vmatprep.mubr.f32.mxu0 0.0
        %590 = vmatmul.mubr.f32.gmra.mxu0 %v518
        %v591 = vpop.f32.mrf.mxu0
        %v592 = vadd.f32 %v511, %v591
        %v593 = vpop.f32.mrf.mxu0
        %594 = vdwg.mxu0
        %v595 = vmax.f32 %v587, 0.0
        %v596 = vmax.f32 %v592, 0.0
        %v597 = vld [vmem:[%s442] sm:$0x3]
        %v598 = vld [vmem:[#allocation9] sm:$0xff]
        %v599 = vld [vmem:[#allocation9 + $0x8] sm:$0xff]
        %v600 = vld [vmem:[%s5] sm:$0x1]
        %v602 = vlaneseq
        %v603 = vshrl.u32 %v602, 7
        %v604 = vsub.s32 0, %v603
        %v605 = vrot.slane %v600, %v604
        %v608 = vsel %vm513, %v597, 0
        %610 = vmatprep.subr.mxu0 0.0
        %611 = vmatpush1.msra.mxu0 0.0
        %612 = vmatprep.subr.mxu0 0.0
        %613 = vmatpush1.msra.mxu0 0.0
        %614 = vmatprep.subr.mxu0 0.0
        %615 = vmatpush1.msra.mxu0 0.0
        %616 = vmatprep.subr.mxu0 0.0
        %617 = vmatpush1.msra.mxu0 0.0
        %618 = vmatprep.subr.mxu0 0.0
        %619 = vmatpush1.msra.mxu0 0.0
        %620 = vmatprep.subr.mxu0 0.0
        %621 = vmatpush1.msra.mxu0 0.0
        %622 = vmatprep.subr.mxu0 0.0
        %623 = vmatpush1.msra.mxu0 0.0
        %624 = vmatprep.subr.mxu0 0.0
        %625 = vmatpush1.msra.mxu0 0.0
        %626 = vmatprep.subr.mxu0 0.0
        %627 = vmatpush1.msra.mxu0 0.0
        %628 = vmatprep.subr.mxu0 0.0
        %629 = vmatpush1.msra.mxu0 0.0
        %630 = vmatprep.subr.mxu0 0.0
        %631 = vmatpush1.msra.mxu0 0.0
        %632 = vmatprep.subr.mxu0 0.0
        %633 = vmatpush1.msra.mxu0 0.0
        %634 = vmatprep.subr.mxu0 0.0
        %635 = vmatpush1.msra.mxu0 0.0
        %636 = vmatprep.subr.mxu0 0.0
        %637 = vmatpush1.msra.mxu0 0.0
        %638 = vmatprep.subr.mxu0 0.0
        %639 = vmatpush1.msra.mxu0 %v599
        %640 = vmatprep.subr.mxu0 0.0
        %641 = vmatpush1.msra.mxu0 %v598
        %642 = vmatprep.subr.mxu0 0.0
        %643 = vmatpush2.msra.mxu0 0.0
        %644 = vmatprep.subr.mxu0 0.0
        %645 = vmatpush2.msra.mxu0 0.0
        %646 = vmatprep.subr.mxu0 0.0
        %647 = vmatpush2.msra.mxu0 0.0
        %648 = vmatprep.subr.mxu0 0.0
        %649 = vmatpush2.msra.mxu0 0.0
        %650 = vmatprep.subr.mxu0 0.0
        %651 = vmatpush2.msra.mxu0 0.0
        %652 = vmatprep.subr.mxu0 0.0
        %653 = vmatpush2.msra.mxu0 0.0
        %654 = vmatprep.subr.mxu0 0.0
        %655 = vmatpush2.msra.mxu0 0.0
        %656 = vmatprep.subr.mxu0 0.0
        %657 = vmatpush2.msra.mxu0 0.0
        %658 = vmatprep.subr.mxu0 0.0
        %659 = vmatpush2.msra.mxu0 0.0
        %660 = vmatprep.subr.mxu0 0.0
        %661 = vmatpush2.msra.mxu0 0.0
        %662 = vmatprep.subr.mxu0 0.0
        %663 = vmatpush2.msra.mxu0 0.0
        %664 = vmatprep.subr.mxu0 0.0
        %665 = vmatpush2.msra.mxu0 0.0
        %666 = vmatprep.subr.mxu0 0.0
        %667 = vmatpush2.msra.mxu0 0.0
        %668 = vmatprep.subr.mxu0 0.0
        %669 = vmatpush2.msra.mxu0 0.0
        %670 = vmatprep.subr.mxu0 0.0
        %671 = vmatpush2.msra.mxu0 0.0
        %672 = vmatprep.subr.mxu0 0.0
        %673 = vmatpush2.msra.mxu0 0.0
        %674 = vmatprep.mubr.f32.mxu0 0.0
        %675 = vmatmul.mubr.f32.gmra.mxu0 %v608
        %v676 = vpop.f32.mrf.mxu0
        %v677 = vadd.f32 %v605, %v676
        %v678 = vpop.f32.mrf.mxu0
        %679 = vdwg.mxu0
        %v680 = vmax.f32 %v677, 0.0
        %v681 = vld [vmem:[#allocation12] sm:$0xff]
        %v682 = vld [vmem:[#allocation12 + $0x8] sm:$0xff]
        %v683 = vld [vmem:[#allocation12 + $0x10] sm:$0xff]
        %v684 = vld [vmem:[#allocation12 + $0x18] sm:$0xff]
        %v685 = vld [vmem:[#allocation12 + $0x20] sm:$0xff]
        %v686 = vld [vmem:[#allocation12 + $0x28] sm:$0xff]
        %v687 = vld [vmem:[#allocation12 + $0x30] sm:$0xff]
        %v688 = vld [vmem:[#allocation12 + $0x38] sm:$0xff]
        %v689 = vld [vmem:[#allocation12 + $0x40] sm:$0xff]
        %v690 = vld [vmem:[#allocation12 + $0x48] sm:$0xff]
        %v691 = vld [vmem:[#allocation12 + $0x50] sm:$0xff]
        %v692 = vld [vmem:[#allocation12 + $0x58] sm:$0xff]
        %v693 = vld [vmem:[#allocation12 + $0x60] sm:$0xff]
        %v694 = vld [vmem:[#allocation12 + $0x68] sm:$0xff]
        %v695 = vld [vmem:[#allocation12 + $0x70] sm:$0xff]
        %v696 = vld [vmem:[#allocation12 + $0x78] sm:$0xff]
        %vm697 = vcmask 261120
        %v699 = vsel %vm697, %v595, 0
        %v702 = vsel %vm697, %v596, 0
        %704 = vmatprep.subr.mxu0 0.0
        %705 = vmatpush1.msra.mxu0 0.0
        %706 = vmatprep.subr.mxu0 0.0
        %707 = vmatpush1.msra.mxu0 0.0
        %708 = vmatprep.subr.mxu0 0.0
        %709 = vmatpush1.msra.mxu0 0.0
        %710 = vmatprep.subr.mxu0 0.0
        %711 = vmatpush1.msra.mxu0 0.0
        %712 = vmatprep.subr.mxu0 0.0
        %713 = vmatpush1.msra.mxu0 0.0
        %714 = vmatprep.subr.mxu0 0.0
        %715 = vmatpush1.msra.mxu0 0.0
        %716 = vmatprep.subr.mxu0 0.0
        %717 = vmatpush1.msra.mxu0 0.0
        %718 = vmatprep.subr.mxu0 0.0
        %719 = vmatpush1.msra.mxu0 0.0
        %720 = vmatprep.subr.mxu0 0.0
        %721 = vmatpush1.msra.mxu0 0.0
        %722 = vmatprep.subr.mxu0 0.0
        %723 = vmatpush1.msra.mxu0 0.0
        %724 = vmatprep.subr.mxu0 0.0
        %725 = vmatpush1.msra.mxu0 0.0
        %726 = vmatprep.subr.mxu0 0.0
        %727 = vmatpush1.msra.mxu0 0.0
        %728 = vmatprep.subr.mxu0 %v694
        %729 = vmatpush1.msra.mxu0 %v693
        %730 = vmatprep.subr.mxu0 %v690
        %731 = vmatpush1.msra.mxu0 %v689
        %732 = vmatprep.subr.mxu0 %v686
        %733 = vmatpush1.msra.mxu0 %v685
        %734 = vmatprep.subr.mxu0 %v682
        %735 = vmatpush1.msra.mxu0 %v681
        %736 = vmatprep.subr.mxu0 0.0
        %737 = vmatpush2.msra.mxu0 0.0
        %738 = vmatprep.subr.mxu0 0.0
        %739 = vmatpush2.msra.mxu0 0.0
        %740 = vmatprep.subr.mxu0 0.0
        %741 = vmatpush2.msra.mxu0 0.0
        %742 = vmatprep.subr.mxu0 0.0
        %743 = vmatpush2.msra.mxu0 0.0
        %744 = vmatprep.subr.mxu0 0.0
        %745 = vmatpush2.msra.mxu0 0.0
        %746 = vmatprep.subr.mxu0 0.0
        %747 = vmatpush2.msra.mxu0 0.0
        %748 = vmatprep.subr.mxu0 0.0
        %749 = vmatpush2.msra.mxu0 0.0
        %750 = vmatprep.subr.mxu0 0.0
        %751 = vmatpush2.msra.mxu0 0.0
        %752 = vmatprep.subr.mxu0 0.0
        %753 = vmatpush2.msra.mxu0 0.0
        %754 = vmatprep.subr.mxu0 0.0
        %755 = vmatpush2.msra.mxu0 0.0
        %756 = vmatprep.subr.mxu0 0.0
        %757 = vmatpush2.msra.mxu0 0.0
        %758 = vmatprep.subr.mxu0 0.0
        %759 = vmatpush2.msra.mxu0 0.0
        %760 = vmatprep.subr.mxu0 0.0
        %761 = vmatpush2.msra.mxu0 0.0
        %762 = vmatprep.subr.mxu0 0.0
        %763 = vmatpush2.msra.mxu0 0.0
        %764 = vmatprep.subr.mxu0 0.0
        %765 = vmatpush2.msra.mxu0 0.0
        %766 = vmatprep.subr.mxu0 0.0
        %767 = vmatpush2.msra.mxu0 0.0
        %768 = vmatprep.mubr.f32.mxu0 0.0
        %769 = vmatmul.mubr.f32.gmra.mxu0 %v699
        %v770 = vpop.f32.mrf.mxu0
        %v771 = vadd.f32 0.0, %v770
        %v772 = vpop.f32.mrf.mxu0
        %v773 = vadd.f32 0.0, %v772
        %774 = vmatprep.mubr.f32.mxu0 0.0
        %775 = vmatmul.mubr.f32.gmra.mxu0 %v702
        %v776 = vpop.f32.mrf.mxu0
        %v777 = vadd.f32 0.0, %v776
        %v778 = vpop.f32.mrf.mxu0
        %v779 = vadd.f32 0.0, %v778
        %780 = vdwg.mxu0
        %781 = vmatprep.subr.mxu0 0.0
        %782 = vmatpush1.msra.mxu0 0.0
        %783 = vmatprep.subr.mxu0 0.0
        %784 = vmatpush1.msra.mxu0 0.0
        %785 = vmatprep.subr.mxu0 0.0
        %786 = vmatpush1.msra.mxu0 0.0
        %787 = vmatprep.subr.mxu0 0.0
        %788 = vmatpush1.msra.mxu0 0.0
        %789 = vmatprep.subr.mxu0 0.0
        %790 = vmatpush1.msra.mxu0 0.0
        %791 = vmatprep.subr.mxu0 0.0
        %792 = vmatpush1.msra.mxu0 0.0
        %793 = vmatprep.subr.mxu0 0.0
        %794 = vmatpush1.msra.mxu0 0.0
        %795 = vmatprep.subr.mxu0 0.0
        %796 = vmatpush1.msra.mxu0 0.0
        %797 = vmatprep.subr.mxu0 0.0
        %798 = vmatpush1.msra.mxu0 0.0
        %799 = vmatprep.subr.mxu0 0.0
        %800 = vmatpush1.msra.mxu0 0.0
        %801 = vmatprep.subr.mxu0 0.0
        %802 = vmatpush1.msra.mxu0 0.0
        %803 = vmatprep.subr.mxu0 0.0
        %804 = vmatpush1.msra.mxu0 0.0
        %805 = vmatprep.subr.mxu0 %v696
        %806 = vmatpush1.msra.mxu0 %v695
        %807 = vmatprep.subr.mxu0 %v692
        %808 = vmatpush1.msra.mxu0 %v691
        %809 = vmatprep.subr.mxu0 %v688
        %810 = vmatpush1.msra.mxu0 %v687
        %811 = vmatprep.subr.mxu0 %v684
        %812 = vmatpush1.msra.mxu0 %v683
        %813 = vmatprep.subr.mxu0 0.0
        %814 = vmatpush2.msra.mxu0 0.0
        %815 = vmatprep.subr.mxu0 0.0
        %816 = vmatpush2.msra.mxu0 0.0
        %817 = vmatprep.subr.mxu0 0.0
        %818 = vmatpush2.msra.mxu0 0.0
        %819 = vmatprep.subr.mxu0 0.0
        %820 = vmatpush2.msra.mxu0 0.0
        %821 = vmatprep.subr.mxu0 0.0
        %822 = vmatpush2.msra.mxu0 0.0
        %823 = vmatprep.subr.mxu0 0.0
        %824 = vmatpush2.msra.mxu0 0.0
        %825 = vmatprep.subr.mxu0 0.0
        %826 = vmatpush2.msra.mxu0 0.0
        %827 = vmatprep.subr.mxu0 0.0
        %828 = vmatpush2.msra.mxu0 0.0
        %829 = vmatprep.subr.mxu0 0.0
        %830 = vmatpush2.msra.mxu0 0.0
        %831 = vmatprep.subr.mxu0 0.0
        %832 = vmatpush2.msra.mxu0 0.0
        %833 = vmatprep.subr.mxu0 0.0
        %834 = vmatpush2.msra.mxu0 0.0
        %835 = vmatprep.subr.mxu0 0.0
        %836 = vmatpush2.msra.mxu0 0.0
        %837 = vmatprep.subr.mxu0 0.0
        %838 = vmatpush2.msra.mxu0 0.0
        %839 = vmatprep.subr.mxu0 0.0
        %840 = vmatpush2.msra.mxu0 0.0
        %841 = vmatprep.subr.mxu0 0.0
        %842 = vmatpush2.msra.mxu0 0.0
        %843 = vmatprep.subr.mxu0 0.0
        %844 = vmatpush2.msra.mxu0 0.0
        %845 = vmatprep.mubr.f32.mxu0 0.0
        %846 = vmatmul.mubr.f32.gmra.mxu0 %v699
        %v847 = vpop.f32.mrf.mxu0
        %v848 = vadd.f32 0.0, %v847
        %v849 = vpop.f32.mrf.mxu0
        %v850 = vadd.f32 0.0, %v849
        %851 = vmatprep.mubr.f32.mxu0 0.0
        %852 = vmatmul.mubr.f32.gmra.mxu0 %v702
        %v853 = vpop.f32.mrf.mxu0
        %v854 = vadd.f32 0.0, %v853
        %v855 = vpop.f32.mrf.mxu0
        %v856 = vadd.f32 0.0, %v855
        %857 = vdwg.mxu0
        %v858 = vld [vmem:[#allocation11] sm:$0xff]
        %v859 = vld [vmem:[#allocation11 + $0x8] sm:$0xff]
        %v860 = vld [vmem:[#allocation11 + $0x10] sm:$0xff]
        %v861 = vld [vmem:[#allocation11 + $0x18] sm:$0xff]
        %v862 = vld [vmem:[#allocation11 + $0x20] sm:$0xff]
        %v863 = vld [vmem:[#allocation11 + $0x28] sm:$0xff]
        %v864 = vld [vmem:[#allocation11 + $0x30] sm:$0xff]
        %v865 = vld [vmem:[#allocation11 + $0x38] sm:$0xff]
        %v866 = vld [vmem:[#allocation11 + $0x40] sm:$0xff]
        %v867 = vld [vmem:[#allocation11 + $0x48] sm:$0xff]
        %v868 = vld [vmem:[#allocation11 + $0x50] sm:$0xff]
        %v869 = vld [vmem:[#allocation11 + $0x58] sm:$0xff]
        %v870 = vld [vmem:[#allocation11 + $0x60] sm:$0xff]
        %v871 = vld [vmem:[#allocation11 + $0x68] sm:$0xff]
        %v872 = vld [vmem:[#allocation11 + $0x70] sm:$0xff]
        %v873 = vld [vmem:[#allocation11 + $0x78] sm:$0xff]
        %v875 = vsel %vm697, %v680, 0
        %877 = vmatprep.subr.mxu0 0.0
        %878 = vmatpush1.msra.mxu0 0.0
        %879 = vmatprep.subr.mxu0 0.0
        %880 = vmatpush1.msra.mxu0 0.0
        %881 = vmatprep.subr.mxu0 0.0
        %882 = vmatpush1.msra.mxu0 0.0
        %883 = vmatprep.subr.mxu0 0.0
        %884 = vmatpush1.msra.mxu0 0.0
        %885 = vmatprep.subr.mxu0 0.0
        %886 = vmatpush1.msra.mxu0 0.0
        %887 = vmatprep.subr.mxu0 0.0
        %888 = vmatpush1.msra.mxu0 0.0
        %889 = vmatprep.subr.mxu0 0.0
        %890 = vmatpush1.msra.mxu0 0.0
        %891 = vmatprep.subr.mxu0 0.0
        %892 = vmatpush1.msra.mxu0 0.0
        %893 = vmatprep.subr.mxu0 0.0
        %894 = vmatpush1.msra.mxu0 0.0
        %895 = vmatprep.subr.mxu0 0.0
        %896 = vmatpush1.msra.mxu0 0.0
        %897 = vmatprep.subr.mxu0 0.0
        %898 = vmatpush1.msra.mxu0 0.0
        %899 = vmatprep.subr.mxu0 0.0
        %900 = vmatpush1.msra.mxu0 0.0
        %901 = vmatprep.subr.mxu0 %v871
        %902 = vmatpush1.msra.mxu0 %v870
        %903 = vmatprep.subr.mxu0 %v867
        %904 = vmatpush1.msra.mxu0 %v866
        %905 = vmatprep.subr.mxu0 %v863
        %906 = vmatpush1.msra.mxu0 %v862
        %907 = vmatprep.subr.mxu0 %v859
        %908 = vmatpush1.msra.mxu0 %v858
        %909 = vmatprep.subr.mxu0 0.0
        %910 = vmatpush2.msra.mxu0 0.0
        %911 = vmatprep.subr.mxu0 0.0
        %912 = vmatpush2.msra.mxu0 0.0
        %913 = vmatprep.subr.mxu0 0.0
        %914 = vmatpush2.msra.mxu0 0.0
        %915 = vmatprep.subr.mxu0 0.0
        %916 = vmatpush2.msra.mxu0 0.0
        %917 = vmatprep.subr.mxu0 0.0
        %918 = vmatpush2.msra.mxu0 0.0
        %919 = vmatprep.subr.mxu0 0.0
        %920 = vmatpush2.msra.mxu0 0.0
        %921 = vmatprep.subr.mxu0 0.0
        %922 = vmatpush2.msra.mxu0 0.0
        %923 = vmatprep.subr.mxu0 0.0
        %924 = vmatpush2.msra.mxu0 0.0
        %925 = vmatprep.subr.mxu0 0.0
        %926 = vmatpush2.msra.mxu0 0.0
        %927 = vmatprep.subr.mxu0 0.0
        %928 = vmatpush2.msra.mxu0 0.0
        %929 = vmatprep.subr.mxu0 0.0
        %930 = vmatpush2.msra.mxu0 0.0
        %931 = vmatprep.subr.mxu0 0.0
        %932 = vmatpush2.msra.mxu0 0.0
        %933 = vmatprep.subr.mxu0 0.0
        %934 = vmatpush2.msra.mxu0 0.0
        %935 = vmatprep.subr.mxu0 0.0
        %936 = vmatpush2.msra.mxu0 0.0
        %937 = vmatprep.subr.mxu0 0.0
        %938 = vmatpush2.msra.mxu0 0.0
        %939 = vmatprep.subr.mxu0 0.0
        %940 = vmatpush2.msra.mxu0 0.0
        %941 = vmatprep.mubr.f32.mxu0 0.0
        %942 = vmatmul.mubr.f32.gmra.mxu0 %v875
        %v943 = vpop.f32.mrf.mxu0
        %v944 = vadd.f32 0.0, %v943
        %v945 = vpop.f32.mrf.mxu0
        %v946 = vadd.f32 0.0, %v945
        %947 = vdwg.mxu0
        %948 = vmatprep.subr.mxu0 0.0
        %949 = vmatpush1.msra.mxu0 0.0
        %950 = vmatprep.subr.mxu0 0.0
        %951 = vmatpush1.msra.mxu0 0.0
        %952 = vmatprep.subr.mxu0 0.0
        %953 = vmatpush1.msra.mxu0 0.0
        %954 = vmatprep.subr.mxu0 0.0
        %955 = vmatpush1.msra.mxu0 0.0
        %956 = vmatprep.subr.mxu0 0.0
        %957 = vmatpush1.msra.mxu0 0.0
        %958 = vmatprep.subr.mxu0 0.0
        %959 = vmatpush1.msra.mxu0 0.0
        %960 = vmatprep.subr.mxu0 0.0
        %961 = vmatpush1.msra.mxu0 0.0
        %962 = vmatprep.subr.mxu0 0.0
        %963 = vmatpush1.msra.mxu0 0.0
        %964 = vmatprep.subr.mxu0 0.0
        %965 = vmatpush1.msra.mxu0 0.0
        %966 = vmatprep.subr.mxu0 0.0
        %967 = vmatpush1.msra.mxu0 0.0
        %968 = vmatprep.subr.mxu0 0.0
        %969 = vmatpush1.msra.mxu0 0.0
        %970 = vmatprep.subr.mxu0 0.0
        %971 = vmatpush1.msra.mxu0 0.0
        %972 = vmatprep.subr.mxu0 %v873
        %973 = vmatpush1.msra.mxu0 %v872
        %974 = vmatprep.subr.mxu0 %v869
        %975 = vmatpush1.msra.mxu0 %v868
        %976 = vmatprep.subr.mxu0 %v865
        %977 = vmatpush1.msra.mxu0 %v864
        %978 = vmatprep.subr.mxu0 %v861
        %979 = vmatpush1.msra.mxu0 %v860
        %980 = vmatprep.subr.mxu0 0.0
        %981 = vmatpush2.msra.mxu0 0.0
        %982 = vmatprep.subr.mxu0 0.0
        %983 = vmatpush2.msra.mxu0 0.0
        %984 = vmatprep.subr.mxu0 0.0
        %985 = vmatpush2.msra.mxu0 0.0
        %986 = vmatprep.subr.mxu0 0.0
        %987 = vmatpush2.msra.mxu0 0.0
        %988 = vmatprep.subr.mxu0 0.0
        %989 = vmatpush2.msra.mxu0 0.0
        %990 = vmatprep.subr.mxu0 0.0
        %991 = vmatpush2.msra.mxu0 0.0
        %992 = vmatprep.subr.mxu0 0.0
        %993 = vmatpush2.msra.mxu0 0.0
        %994 = vmatprep.subr.mxu0 0.0
        %995 = vmatpush2.msra.mxu0 0.0
        %996 = vmatprep.subr.mxu0 0.0
        %997 = vmatpush2.msra.mxu0 0.0
        %998 = vmatprep.subr.mxu0 0.0
        %999 = vmatpush2.msra.mxu0 0.0
        %1000 = vmatprep.subr.mxu0 0.0
        %1001 = vmatpush2.msra.mxu0 0.0
        %1002 = vmatprep.subr.mxu0 0.0
        %1003 = vmatpush2.msra.mxu0 0.0
        %1004 = vmatprep.subr.mxu0 0.0
        %1005 = vmatpush2.msra.mxu0 0.0
        %1006 = vmatprep.subr.mxu0 0.0
        %1007 = vmatpush2.msra.mxu0 0.0
        %1008 = vmatprep.subr.mxu0 0.0
        %1009 = vmatpush2.msra.mxu0 0.0
        %1010 = vmatprep.subr.mxu0 0.0
        %1011 = vmatpush2.msra.mxu0 0.0
        %1012 = vmatprep.mubr.f32.mxu0 0.0
        %1013 = vmatmul.mubr.f32.gmra.mxu0 %v875
        %v1014 = vpop.f32.mrf.mxu0
        %v1015 = vadd.f32 0.0, %v1014
        %v1016 = vpop.f32.mrf.mxu0
        %v1017 = vadd.f32 0.0, %v1016
        %1018 = vdwg.mxu0
        %v1023 = vcombine.low %v944, %v946
        %v1024 = vcombine.low %v1015, %v1017
        %v1026 = vunpack.c.l.s4 1966171168
        %v1027 = vunpack.c.0.s8 %v1026
        %v1028 = vlaneseq
        %v1029 = vshrl.u32 %v1028, 7
        %v1030 = vsub.s32 %v1027, %v1029
        %v1031 = vrot.slane %v1023, %v1030
        %v1033 = vunpack.c.l.s4 1966171168
        %v1034 = vunpack.c.0.s8 %v1033
        %v1035 = vlaneseq
        %v1036 = vshrl.u32 %v1035, 7
        %v1037 = vsub.s32 %v1034, %v1036
        %v1038 = vrot.slane %v1024, %v1037
        %v1039 = vcombine.low %v1031, %v1038
        %v1040 = vcombine.high %v1031, %v1038
        %v1042 = vunpack.c.l.s4 1966171168
        %v1043 = vunpack.c.0.s8 %v1042
        %v1044 = vlaneseq
        %v1045 = vshrl.u32 %v1044, 7
        %v1046 = vsub.s32 %v1043, %v1045
        %v1047 = vrot.slane %v1039, %v1046
        %v1049 = vunpack.c.l.s4 1966171168
        %v1050 = vunpack.c.0.s8 %v1049
        %v1051 = vlaneseq
        %v1052 = vshrl.u32 %v1051, 7
        %v1053 = vsub.s32 %v1050, %v1052
        %v1054 = vrot.slane %v1040, %v1053
        %v1055 = vlaneseq
        %v1056 = vshrl.u32 %v1055, 7
        %v1057 = vsub.s32 0, %v1056
        %v1058 = vrot.slane %v1047, %v1057
        %v1059 = vlaneseq
        %v1060 = vshrl.u32 %v1059, 7
        %v1061 = vsub.s32 1, %v1060
        %v1062 = vrot.slane %v1047, %v1061
        %v1063 = vlaneseq
        %v1064 = vshrl.u32 %v1063, 7
        %v1065 = vsub.s32 2, %v1064
        %v1066 = vrot.slane %v1047, %v1065
        %v1067 = vlaneseq
        %v1068 = vshrl.u32 %v1067, 7
        %v1069 = vsub.s32 3, %v1068
        %v1070 = vrot.slane %v1047, %v1069
        %v1071 = vlaneseq
        %v1072 = vshrl.u32 %v1071, 7
        %v1073 = vsub.s32 0, %v1072
        %v1074 = vrot.slane %v1054, %v1073
        %v1075 = vlaneseq
        %v1076 = vshrl.u32 %v1075, 7
        %v1077 = vsub.s32 1, %v1076
        %v1078 = vrot.slane %v1054, %v1077
        %v1079 = vlaneseq
        %v1080 = vshrl.u32 %v1079, 7
        %v1081 = vsub.s32 2, %v1080
        %v1082 = vrot.slane %v1054, %v1081
        %v1083 = vlaneseq
        %v1084 = vshrl.u32 %v1083, 7
        %v1085 = vsub.s32 3, %v1084
        %v1086 = vrot.slane %v1054, %v1085
        %v1095 = vadd.f32 %v771, %v1058
        %v1096 = vadd.f32 %v773, %v1062
        %v1097 = vadd.f32 %v848, %v1066
        %v1098 = vadd.f32 %v850, %v1070
        %v1099 = vadd.f32 %v777, %v1074
        %v1100 = vadd.f32 %v779, %v1078
        %v1101 = vadd.f32 %v854, %v1082
        %v1102 = vadd.f32 %v856, %v1086
        %v1103 = vld [vmem:[%s8] sm:$0xf]
        %v1105 = vlaneseq
        %v1106 = vshrl.u32 %v1105, 7
        %v1107 = vsub.s32 0, %v1106
        %v1108 = vrot.slane %v1103, %v1107
        %v1109 = vlaneseq
        %v1110 = vshrl.u32 %v1109, 7
        %v1111 = vsub.s32 1, %v1110
        %v1112 = vrot.slane %v1103, %v1111
        %v1113 = vlaneseq
        %v1114 = vshrl.u32 %v1113, 7
        %v1115 = vsub.s32 2, %v1114
        %v1116 = vrot.slane %v1103, %v1115
        %v1117 = vlaneseq
        %v1118 = vshrl.u32 %v1117, 7
        %v1119 = vsub.s32 3, %v1118
        %v1120 = vrot.slane %v1103, %v1119
        %v1125 = vadd.f32 %v1095, %v1108
        %v1126 = vadd.f32 %v1096, %v1112
        %v1127 = vadd.f32 %v1097, %v1116
        %v1128 = vadd.f32 %v1098, %v1120
        %v1129 = vadd.f32 %v1099, %v1108
        %v1130 = vadd.f32 %v1100, %v1112
        %v1131 = vadd.f32 %v1101, %v1116
        %v1132 = vadd.f32 %v1102, %v1120
        %v1133 = vmax.f32 %v1125, 0.0
        %v1134 = vmax.f32 %v1126, 0.0
        %v1135 = vmax.f32 %v1127, 0.0
        %v1136 = vmax.f32 %v1128, 0.0
        %v1137 = vmax.f32 %v1129, 0.0
        %v1138 = vmax.f32 %v1130, 0.0
        %v1139 = vmax.f32 %v1131, 0.0
        %v1140 = vmax.f32 %v1132, 0.0
        %v1141 = vld [vmem:[%s9] sm:$0xf]
        %v1143 = vlaneseq
        %v1144 = vshrl.u32 %v1143, 7
        %v1145 = vsub.s32 0, %v1144
        %v1146 = vrot.slane %v1141, %v1145
        %v1147 = vlaneseq
        %v1148 = vshrl.u32 %v1147, 7
        %v1149 = vsub.s32 1, %v1148
        %v1150 = vrot.slane %v1141, %v1149
        %v1151 = vlaneseq
        %v1152 = vshrl.u32 %v1151, 7
        %v1153 = vsub.s32 2, %v1152
        %v1154 = vrot.slane %v1141, %v1153
        %v1155 = vlaneseq
        %v1156 = vshrl.u32 %v1155, 7
        %v1157 = vsub.s32 3, %v1156
        %v1158 = vrot.slane %v1141, %v1157
        %v1163 = vmul.f32 %v1133, %v1146
        %v1164 = vmul.f32 %v1134, %v1150
        %v1165 = vmul.f32 %v1135, %v1154
        %v1166 = vmul.f32 %v1136, %v1158
        %v1167 = vmul.f32 %v1137, %v1146
        %v1168 = vmul.f32 %v1138, %v1150
        %v1169 = vmul.f32 %v1139, %v1154
        %v1170 = vmul.f32 %v1140, %v1158
        %v1171 = vadd.f32 %v1163, %v1164
        %v1172 = vadd.f32 %v1171, %v1165
        %v1173 = vadd.f32 %v1172, %v1166
        %1174 = vadd.xlane.f32.xlu0 %v1173
        %v1175 = vpop.xlane.xlu0 %1174
        %v1176 = vadd.f32 %v1167, %v1168
        %v1177 = vadd.f32 %v1176, %v1169
        %v1178 = vadd.f32 %v1177, %v1170
        %1179 = vadd.xlane.f32.xlu0 %v1178
        %v1180 = vpop.xlane.xlu0 %1179
        %v1181 = vld [vmem:[#allocation2] sm:$0x1]
        %v1183 = vlaneseq
        %v1184 = vshrl.u32 %v1183, 7
        %v1185 = vsub.s32 0, %v1184
        %v1186 = vrot.slane %v1181, %v1185
        %1187 = vset.pattern.permute.xlu0 0
        %1188 = vperm.xlu0 %1187, %v1186
        %v1189 = vpop.permute.xlu0 %1188
        %v1191 = vadd.f32 %v1175, %v1189
        %v1192 = vadd.f32 %v1180, %v1189
        %v1195 = vlaneseq
        %v1196 = vand.u32 %v1195, 127
        %v1197 = vlaneseq
        %v1198 = vshrl.u32 %v1197, 7
        %v1199 = vsub.s32 %v1196, %v1198
        %v1200 = vrot.slane %v1191, %v1199
        %v1201 = vlaneseq
        %v1202 = vshrl.u32 %v1201, 7
        %v1203 = vsub.s32 %v1196, %v1202
        %v1204 = vrot.slane %v1192, %v1203
        %vm1205 = vcmask 1041409
        %v1206 = vsel %vm1205, %v1204, %v1200
        %vm1208 = vcmask 58368
        %1209 = vst.msk [vmem:[%s501] sm:$0x3] %vm1208, %v1206
        %s1210 = sand.u32 %s284, 1
        %s1211 = scalar_lea.sflag [#allocation5], %s1210
        %s1212 = sand.u32 %s284, 1
        %s1213 = smul.addr %s1212, 2
        %s1214 = scalar_lea.vmem [#allocation14], %s1213
        // Predicated region
        $region89: #{tpu_custom_call.1} parent=63 // pred_check
          %p1215 = pneg %p294
        $region90: #{tpu_custom_call.1} parent=63 // pred_check_branch
          %1217 = sbr.rel (%p1215) target = $region92
        $region91: #{tpu_custom_call.1} parent=63 // pred_region
          %s1219 = ssub.s32 32, 32
          %1220 = vsyncadd %s1211, %s1219
          %s1221 = smul.addr %s35, 32
          %s1222 = scalar_lea.hbm %s11, %s1221
          %s1224 = sshll.u32 %s1214, 4
          %s1225 = int_to_ptr.vmem [resolvable:$true] %s1224
          %1227 = dma.vmem_to_hbm [thread:$0]  %s1225, 32, %s1222, %s1211
        $region92: #{tpu_custom_call.1} parent=63 // pred_fallthru
          _
      $region64: #{tpu_custom_call.1} parent=5 // pred_fallthru
        _
      %p1228 = scmp.le.s32.totalorder 2, %s30
      // Predicated region
      $region93: #{tpu_custom_call.1} parent=5 // pred_check
        %p1229 = pneg %p1228
      $region94: #{tpu_custom_call.1} parent=5 // pred_check_branch
        %1231 = sbr.rel (%p1229) target = $region96
      $region95: #{tpu_custom_call.1} parent=5 // pred_region
        %s1232 = ssub.s32 %s30, 2
        // Predicated region
        $region97: #{tpu_custom_call.1} parent=95 // pred_check
          %p1233 = pneg %p300
        $region98: #{tpu_custom_call.1} parent=95 // pred_check_branch
          %1235 = sbr.rel (%p1233) target = $region100
        $region99: #{tpu_custom_call.1} parent=95 // pred_region
          %s1236 = sand.u32 %s285, 1
          %s1237 = scalar_lea.sflag [#allocation5], %s1236
          %s1238 = sand.u32 %s285, 1
          %s1239 = smul.addr %s1238, 2
          %s1240 = scalar_lea.vmem [#allocation14], %s1239
          %1241 = dma.done %s1237, 32
        $region100: #{tpu_custom_call.1} parent=95 // pred_fallthru
          _
      $region96: #{tpu_custom_call.1} parent=5 // pred_fallthru
        _
    $region6: #{tpu_custom_call.1} parent=1 // loop_footer
      %s34 = sadd.s32 1, %s30
    $region7: #{tpu_custom_call.1} parent=1 // loop_footer_branch
      %29 = sbr.rel target = $region3
    $region8: #{tpu_custom_call.1} parent=1 // loop_exit
      _
    %1242 = vsyncpa [#allocation4], 1
    %s1243 = scalar_lea.sflag [#allocation4], 1
    %1244 = vsyncpa %s1243, 1
    %1245 = vsyncpa [#allocation7], 1
    %s1246 = scalar_lea.sflag [#allocation7], 1
    %1247 = vsyncpa %s1246, 1
    %1248 = vsyncpa [#allocation10], 1
    %1249 = vsyncpa [#allocation13], 1
    %1250 = vsyncpa [#allocation5], 1
    %s1251 = scalar_lea.sflag [#allocation5], 1
    %1252 = vsyncpa %s1251, 1

</llo_original>
